<compile_context>
chip_gen: v6e
topology: v6e:2x2x1
jax: 0.10.0
libtpu: 0.0.40
codegen_flags: <defaults>
</compile_context>

<pallas_src>
import jax
import jax.numpy as jnp
from jax.experimental import pallas as pl
from jax.experimental.pallas import tpu as pltpu

MAX_LENGTH = 10
HIDDEN_SIZE = 32
OUTPUT_SIZE = 16

H, L, V = HIDDEN_SIZE, MAX_LENGTH, OUTPUT_SIZE

DATA_ROWS = 16          # encoder outputs in rows 0:L, hidden state in row L, rest zero
K_ROWS = 2 * H + 8      # 72: emb-half rows, h-half rows, bias row, zero pad (mult of 8)
BIAS_ROW = 2 * H        # 64
OUT_ROWS = 8            # packed output tile rows
NEG_BIG = -1.0e30       # "-inf" bias padding -> exp underflows to exactly 0

# 128-lane column groups of the fused weight slab
C_ATTN = 0              # stage-1: attention logits       (lanes 0:L real, pad bias NEG_BIG)
C_GATEH = 128           # stage-1: h-side GRU gates       [r | z | 0 | n_h]
C_COMBE = 256           # stage-1: emb-side attn_combine  (lanes 0:H real)
C_COMBA = 384           # stage-3: attn_applied-side attn_combine
C_GATEX = 512           # stage-4: x-side GRU gates       [r | z | n_x | 0]
C_OUT = 640             # stage-5: output projection      (lanes 0:V real, pad bias NEG_BIG)
W_COLS = 768
S1_COLS = 384           # width of the fused stage-1 dot


def attn_decoder_kernel(
    idx_ref,      # SMEM (1,) int32 token index
    data_ref,     # VMEM (16, H): rows 0:L encoder outputs, row L hidden, rest zero
    emb_ref,      # VMEM (V, H) embedding table
    w_ref,        # VMEM (72, 768) fused weight slab (row 64 = bias row)
    out_ref,      # VMEM (8, 128) packed output: rows = [logp | h_new | attn_w | 0...]
):
    f32 = jnp.float32

    idx = idx_ref[0]
    emb = emb_ref[pl.ds(idx, 1), :]                       # (1, H) dynamic row gather
    h = data_ref[L:L + 1, :]                              # (1, H) hidden (packed row L)
    # TODO(synk): nn.Dropout omitted (eval-mode identity; no RNG state in this kernel)

    # ---- stage 1: ONE fused dot for every dependency-free matmul, biases folded in ----
    # LHS = [emb | h | 1 | 0...] (1, 72); slab row 64 carries the biases.
    lhs1 = jnp.concatenate(
        [emb, h, jnp.ones((1, 1), f32), jnp.zeros((1, K_ROWS - 2 * H - 1), f32)], axis=1)
    s1 = jnp.dot(lhs1, w_ref[:, 0:S1_COLS], preferred_element_type=f32)     # (1, 384)

    # ---- attention softmax over the full 128-lane block ----
    # padded lanes carry a -1e30 bias -> exp underflows to exactly 0 (no slicing needed)
    attn_logits = s1[:, 0:128]
    m = jnp.max(attn_logits, axis=-1, keepdims=True)
    e = jnp.exp(attn_logits - m)
    attn_w = e / jnp.sum(e, axis=-1, keepdims=True)       # exact division (parity)

    # ---- attn_applied = bmm(attn_weights, encoder_outputs) ----
    # lanes >= L of attn_w are exactly 0, so the hidden / zero rows of data_ref drop out.
    attn_applied = jnp.dot(attn_w[:, 0:DATA_ROWS], data_ref[...],
                           preferred_element_type=f32)                      # (1, H)

    # ---- output = relu(attn_combine(cat(embedded, attn_applied))) ----
    comb_a = jnp.dot(attn_applied, w_ref[0:H, C_COMBA:C_COMBA + 128],
                     preferred_element_type=f32)                            # (1, 128)
    x = jnp.maximum(s1[:, C_COMBE:C_COMBE + 128] + comb_a, 0.0)[:, 0:H]     # (1, H)

    # ---- single GRU step: x-side gates in one wide dot, h-side gates from stage 1 ----
    gates = (jnp.dot(x, w_ref[0:H, C_GATEX:C_GATEX + 128], preferred_element_type=f32)
             + w_ref[BIAS_ROW:BIAS_ROW + 1, C_GATEX:C_GATEX + 128]
             + s1[:, C_GATEH:C_GATEH + 128])              # (1, 128) = [r | z | n_x | n_h]
    sig = jax.nn.sigmoid(gates)                           # full-vreg sigmoid, slice results
    r = sig[:, 0:H]
    z = sig[:, H:2 * H]
    n = jnp.tanh(gates[:, 2 * H:3 * H] + r * gates[:, 3 * H:4 * H])
    h_new = (1.0 - z) * n + z * h                         # (1, H)

    # ---- output = log_softmax(out(gru_output)) over the full 128-lane block ----
    out_logits = (jnp.dot(h_new, w_ref[0:H, C_OUT:C_OUT + 128],
                          preferred_element_type=f32)
                  + w_ref[BIAS_ROW:BIAS_ROW + 1, C_OUT:C_OUT + 128])        # pad = -1e30
    mo = jnp.max(out_logits, axis=-1, keepdims=True)
    shifted = out_logits - mo
    logp = shifted - jnp.log(jnp.sum(jnp.exp(shifted), axis=-1, keepdims=True))

    # ---- single dense (8,128) writeback ----
    h_row = jnp.concatenate([h_new, jnp.zeros((1, 128 - H), f32)], axis=1)
    out_ref[...] = jnp.concatenate(
        [logp, h_row, attn_w, jnp.zeros((OUT_ROWS - 3, 128), f32)], axis=0)


def init_params(key, hidden_size, output_size, max_length):
    """Deterministic PyTorch-style uniform init; weights stored pre-transposed as [in, out]."""
    H_, V_, L_ = hidden_size, output_size, max_length
    keys = jax.random.split(key, 16)

    def uni(k, shape, fan_in):
        bound = 1.0 / jnp.sqrt(jnp.float32(fan_in))
        return jax.random.uniform(k, shape, jnp.float32, -bound, bound)

    params = {}
    # nn.Embedding(V, H): N(0,1)
    params["emb"] = jax.random.normal(keys[0], (V_, H_), jnp.float32)
    # nn.Linear(2H, L) -> split by input half, transpose to (H, L)
    w_attn = uni(keys[1], (L_, 2 * H_), 2 * H_)
    params["w_attn_e"] = w_attn[:, :H_].T
    params["w_attn_h"] = w_attn[:, H_:].T
    params["b_attn"] = uni(keys[2], (1, L_), 2 * H_)
    # nn.Linear(2H, H)
    w_comb = uni(keys[3], (H_, 2 * H_), 2 * H_)
    params["w_comb_e"] = w_comb[:, :H_].T
    params["w_comb_a"] = w_comb[:, H_:].T
    params["b_comb"] = uni(keys[4], (1, H_), 2 * H_)
    # nn.GRU(H, H): weight_ih (3H, H), weight_hh (3H, H), gate order r, z, n
    w_ih = uni(keys[5], (3 * H_, H_), H_)
    w_hh = uni(keys[6], (3 * H_, H_), H_)
    b_ih = uni(keys[7], (3 * H_,), H_)
    b_hh = uni(keys[8], (3 * H_,), H_)
    params["w_ir"], params["w_iz"], params["w_in"] = (
        w_ih[:H_].T, w_ih[H_:2 * H_].T, w_ih[2 * H_:].T)
    params["w_hr"], params["w_hz"], params["w_hn"] = (
        w_hh[:H_].T, w_hh[H_:2 * H_].T, w_hh[2 * H_:].T)
    params["b_ir"], params["b_iz"], params["b_in"] = (
        b_ih[:H_].reshape(1, H_), b_ih[H_:2 * H_].reshape(1, H_), b_ih[2 * H_:].reshape(1, H_))
    params["b_hr"], params["b_hz"], params["b_hn"] = (
        b_hh[:H_].reshape(1, H_), b_hh[H_:2 * H_].reshape(1, H_), b_hh[2 * H_:].reshape(1, H_))
    # nn.Linear(H, V)
    params["w_out"] = uni(keys[9], (V_, H_), H_).T
    params["b_out"] = uni(keys[10], (1, V_), H_)
    return params


def pack_params(params):
    """Pack all weights + biases into one (72, 768) slab; biases live in row 64."""
    w = jnp.zeros((K_ROWS, W_COLS), jnp.float32)

    # stage-1 attention block (softmax runs on the full 128 lanes -> pad bias with -1e30)
    w = w.at[0:H, C_ATTN:C_ATTN + L].set(params["w_attn_e"])
    w = w.at[H:2 * H, C_ATTN:C_ATTN + L].set(params["w_attn_h"])
    w = w.at[BIAS_ROW, C_ATTN:C_ATTN + L].set(params["b_attn"][0])
    w = w.at[BIAS_ROW, C_ATTN + L:C_ATTN + 128].set(NEG_BIG)

    # stage-1 h-side GRU gate block: [W_hr | W_hz | 0 | W_hn], bias [b_hr | b_hz | 0 | b_hn]
    w = w.at[H:2 * H, C_GATEH + 0 * H:C_GATEH + 1 * H].set(params["w_hr"])
    w = w.at[H:2 * H, C_GATEH + 1 * H:C_GATEH + 2 * H].set(params["w_hz"])
    w = w.at[H:2 * H, C_GATEH + 3 * H:C_GATEH + 4 * H].set(params["w_hn"])
    w = w.at[BIAS_ROW, C_GATEH + 0 * H:C_GATEH + 1 * H].set(params["b_hr"][0])
    w = w.at[BIAS_ROW, C_GATEH + 1 * H:C_GATEH + 2 * H].set(params["b_hz"][0])
    w = w.at[BIAS_ROW, C_GATEH + 3 * H:C_GATEH + 4 * H].set(params["b_hn"][0])

    # stage-1 emb-side attn_combine block (carries the combine bias)
    w = w.at[0:H, C_COMBE:C_COMBE + H].set(params["w_comb_e"])
    w = w.at[BIAS_ROW, C_COMBE:C_COMBE + H].set(params["b_comb"][0])

    # stage-3 attn_applied-side attn_combine block
    w = w.at[0:H, C_COMBA:C_COMBA + H].set(params["w_comb_a"])

    # stage-4 x-side GRU gate block: [W_ir | W_iz | W_in | 0], bias [b_ir | b_iz | b_in | 0]
    w = w.at[0:H, C_GATEX + 0 * H:C_GATEX + 1 * H].set(params["w_ir"])
    w = w.at[0:H, C_GATEX + 1 * H:C_GATEX + 2 * H].set(params["w_iz"])
    w = w.at[0:H, C_GATEX + 2 * H:C_GATEX + 3 * H].set(params["w_in"])
    w = w.at[BIAS_ROW, C_GATEX + 0 * H:C_GATEX + 1 * H].set(params["b_ir"][0])
    w = w.at[BIAS_ROW, C_GATEX + 1 * H:C_GATEX + 2 * H].set(params["b_iz"][0])
    w = w.at[BIAS_ROW, C_GATEX + 2 * H:C_GATEX + 3 * H].set(params["b_in"][0])

    # stage-5 output projection block (log_softmax runs on full 128 lanes -> -1e30 pad)
    w = w.at[0:H, C_OUT:C_OUT + V].set(params["w_out"])
    w = w.at[BIAS_ROW, C_OUT:C_OUT + V].set(params["b_out"][0])
    w = w.at[BIAS_ROW, C_OUT + V:C_OUT + 128].set(NEG_BIG)

    return {"emb": params["emb"], "w": w}


def attn_decoder_forward(token_idx, hidden, encoder_outputs, packed):
    """token_idx: int32 scalar-like; hidden: (1,1,H); encoder_outputs: (L,H)."""
    # clamp index: VMEM refs have no runtime OOB check.
    # (valid only because vocab == OUTPUT_SIZE in this module's config)
    idx = jnp.clip(jnp.asarray(token_idx, jnp.int32), 0, V - 1).reshape((1,))

    # pack encoder outputs + hidden into one (16, H) buffer (fewer DMAs / descriptors)
    data = jnp.zeros((DATA_ROWS, H), jnp.float32)
    data = data.at[0:L, :].set(encoder_outputs.astype(jnp.float32))
    data = data.at[L, :].set(hidden.reshape(H).astype(jnp.float32))

    vmem = pl.BlockSpec(memory_space=pltpu.MemorySpace.VMEM)
    smem = pl.BlockSpec(memory_space=pltpu.MemorySpace.SMEM)

    out = pl.pallas_call(
        attn_decoder_kernel,
        out_shape=jax.ShapeDtypeStruct((OUT_ROWS, 128), jnp.float32),
        in_specs=[smem, vmem, vmem, vmem],
        out_specs=vmem,
    )(idx, data, packed["emb"], packed["w"])

    # unpack; match PyTorch return shapes: (1, V), (1, 1, H), (1, L)
    logp = out[0:1, :V]
    h_new = out[1:2, :H].reshape(1, 1, H)
    attn_w = out[2:3, :L]
    return logp, h_new, attn_w


def reference_forward(token_idx, hidden, encoder_outputs, params):
    """Plain-JAX reference for numerical verification."""
    emb = params["emb"][token_idx].reshape(1, H)
    h = hidden.reshape(1, H)
    attn_logits = emb @ params["w_attn_e"] + h @ params["w_attn_h"] + params["b_attn"]
    attn_w = jax.nn.softmax(attn_logits, axis=1)
    attn_applied = attn_w @ encoder_outputs
    x = jnp.maximum(
        emb @ params["w_comb_e"] + attn_applied @ params["w_comb_a"] + params["b_comb"], 0.0)
    r = jax.nn.sigmoid(x @ params["w_ir"] + params["b_ir"] + h @ params["w_hr"] + params["b_hr"])
    z = jax.nn.sigmoid(x @ params["w_iz"] + params["b_iz"] + h @ params["w_hz"] + params["b_hz"])
    n = jnp.tanh(x @ params["w_in"] + params["b_in"] + r * (h @ params["w_hn"] + params["b_hn"]))
    h_new = (1.0 - z) * n + z * h
    logits = h_new @ params["w_out"] + params["b_out"]
    return jax.nn.log_softmax(logits, axis=1), h_new.reshape(1, 1, H), attn_w


if __name__ == "__main__":
    key = jax.random.PRNGKey(0)
    k_params, k_hidden, k_enc = jax.random.split(key, 3)

    params = init_params(k_params, HIDDEN_SIZE, OUTPUT_SIZE, MAX_LENGTH)
    packed = pack_params(params)

    token_idx = jnp.int32(3)                                         # decoder input token
    hidden = jax.random.normal(k_hidden, (1, 1, HIDDEN_SIZE), jnp.float32)
    encoder_outputs = jax.random.normal(k_enc, (MAX_LENGTH, HIDDEN_SIZE), jnp.float32)

    fwd = jax.jit(attn_decoder_forward)
    logp, h_new, attn_w = fwd(token_idx, hidden, encoder_outputs, packed)
    jax.block_until_ready((logp, h_new, attn_w))

    ref_logp, ref_h, ref_w = reference_forward(token_idx, hidden, encoder_outputs, params)
    assert logp.shape == (1, OUTPUT_SIZE)
    assert h_new.shape == (1, 1, HIDDEN_SIZE)
    assert attn_w.shape == (1, MAX_LENGTH)
    # exact softmax division -> expected error ~1e-6; 2e-4 leaves ample headroom
    assert jnp.allclose(logp, ref_logp, atol=2e-4), "log-softmax output mismatch"
    assert jnp.allclose(h_new, ref_h, atol=2e-4), "hidden state mismatch"
    assert jnp.allclose(attn_w, ref_w, atol=2e-4), "attention weights mismatch"

    print("KERNEL_OK")
</pallas_src>

<mosaic_0001>
module attributes {stable_mosaic.version = 11 : i64} {
  func.func @attn_decoder_kernel(%arg0: memref<1xi32, #tpu.memory_space<smem>>, %arg1: memref<16x32xf32, #tpu.memory_space<vmem>>, %arg2: memref<16x32xf32, #tpu.memory_space<vmem>>, %arg3: memref<72x768xf32, #tpu.memory_space<vmem>>, %arg4: memref<8x128xf32, #tpu.memory_space<vmem>>) attributes {dimension_semantics = [], scalar_prefetch = 0 : i64, scratch_operands = 0 : i64, tpu.core_type = #tpu.core_type<tc>} {
    %c0 = arith.constant 0 : index
    %0 = memref.load %arg0[%c0] : memref<1xi32, #tpu.memory_space<smem>>
    %1 = arith.index_cast %0 : i32 to index
    %c0_0 = arith.constant 0 : index
    %2 = vector.load %arg2[%1, %c0_0] : memref<16x32xf32, #tpu.memory_space<vmem>>, vector<1x32xf32>
    %c10 = arith.constant 10 : index
    %c0_1 = arith.constant 0 : index
    %3 = vector.load %arg1[%c10, %c0_1] : memref<16x32xf32, #tpu.memory_space<vmem>>, vector<1x32xf32>
    %cst = arith.constant 1.000000e+00 : f32
    %4 = vector.broadcast %cst : f32 to vector<1x1xf32>
    %cst_2 = arith.constant 0.000000e+00 : f32
    %5 = vector.broadcast %cst_2 : f32 to vector<1x7xf32>
    %6 = tpu.concatenate %2, %3, %4, %5 in 1 : vector<1x32xf32>, vector<1x32xf32>, vector<1x1xf32>, vector<1x7xf32> -> vector<1x72xf32>
    %c0_3 = arith.constant 0 : index
    %c0_4 = arith.constant 0 : index
    %7 = vector.load %arg3[%c0_3, %c0_4] : memref<72x768xf32, #tpu.memory_space<vmem>>, vector<72x384xf32>
    %cst_5 = arith.constant dense<0.000000e+00> : vector<1x384xf32>
    %8 = tpu.matmul %6, %7, %cst_5 {dimension_numbers = #tpu.dot_dimension_numbers<[1], [0], [0], [1], [0, 0, 1, 1], [], []>} : vector<1x72xf32>, vector<72x384xf32>, vector<1x384xf32> -> vector<1x384xf32>
    %9 = vector.extract_strided_slice %8 {offsets = [0, 0], sizes = [1, 128], strides = [1, 1]} : vector<1x384xf32> to vector<1x128xf32>
    %cst_6 = arith.constant dense<0xFF800000> : vector<1xf32>
    %10 = vector.multi_reduction <maximumf>, %9, %cst_6 [1] : vector<1x128xf32> to vector<1xf32>
    %11 = vector.shape_cast %10 : vector<1xf32> to vector<1x1xf32>
    %12 = vector.broadcast %11 : vector<1x1xf32> to vector<1x128xf32>
    %13 = arith.subf %9, %12 : vector<1x128xf32>
    %14 = math.exp %13 : vector<1x128xf32>
    %cst_7 = arith.constant dense<0.000000e+00> : vector<1xf32>
    %15 = vector.multi_reduction <add>, %14, %cst_7 [1] : vector<1x128xf32> to vector<1xf32>
    %16 = vector.shape_cast %15 : vector<1xf32> to vector<1x1xf32>
    %17 = vector.broadcast %16 : vector<1x1xf32> to vector<1x128xf32>
    %18 = arith.divf %14, %17 : vector<1x128xf32>
    %19 = vector.extract_strided_slice %18 {offsets = [0, 0], sizes = [1, 16], strides = [1, 1]} : vector<1x128xf32> to vector<1x16xf32>
    %c0_8 = arith.constant 0 : index
    %c0_9 = arith.constant 0 : index
    %20 = vector.load %arg1[%c0_8, %c0_9] : memref<16x32xf32, #tpu.memory_space<vmem>>, vector<16x32xf32>
    %cst_10 = arith.constant dense<0.000000e+00> : vector<1x32xf32>
    %21 = tpu.matmul %19, %20, %cst_10 {dimension_numbers = #tpu.dot_dimension_numbers<[1], [0], [0], [1], [0, 0, 1, 1], [], []>} : vector<1x16xf32>, vector<16x32xf32>, vector<1x32xf32> -> vector<1x32xf32>
    %c0_11 = arith.constant 0 : index
    %c384 = arith.constant 384 : index
    %22 = vector.load %arg3[%c0_11, %c384] : memref<72x768xf32, #tpu.memory_space<vmem>>, vector<32x128xf32>
    %cst_12 = arith.constant dense<0.000000e+00> : vector<1x128xf32>
    %23 = tpu.matmul %21, %22, %cst_12 {dimension_numbers = #tpu.dot_dimension_numbers<[1], [0], [0], [1], [0, 0, 1, 1], [], []>} : vector<1x32xf32>, vector<32x128xf32>, vector<1x128xf32> -> vector<1x128xf32>
    %24 = vector.extract_strided_slice %8 {offsets = [0, 256], sizes = [1, 128], strides = [1, 1]} : vector<1x384xf32> to vector<1x128xf32>
    %25 = arith.addf %24, %23 : vector<1x128xf32>
    %cst_13 = arith.constant 0.000000e+00 : f32
    %26 = vector.broadcast %cst_13 : f32 to vector<1x128xf32>
    %27 = arith.maximumf %25, %26 : vector<1x128xf32>
    %28 = vector.extract_strided_slice %27 {offsets = [0, 0], sizes = [1, 32], strides = [1, 1]} : vector<1x128xf32> to vector<1x32xf32>
    %c0_14 = arith.constant 0 : index
    %c512 = arith.constant 512 : index
    %29 = vector.load %arg3[%c0_14, %c512] : memref<72x768xf32, #tpu.memory_space<vmem>>, vector<32x128xf32>
    %cst_15 = arith.constant dense<0.000000e+00> : vector<1x128xf32>
    %30 = tpu.matmul %28, %29, %cst_15 {dimension_numbers = #tpu.dot_dimension_numbers<[1], [0], [0], [1], [0, 0, 1, 1], [], []>} : vector<1x32xf32>, vector<32x128xf32>, vector<1x128xf32> -> vector<1x128xf32>
    %c64 = arith.constant 64 : index
    %c512_16 = arith.constant 512 : index
    %31 = vector.load %arg3[%c64, %c512_16] : memref<72x768xf32, #tpu.memory_space<vmem>>, vector<1x128xf32>
    %32 = arith.addf %30, %31 : vector<1x128xf32>
    %33 = vector.extract_strided_slice %8 {offsets = [0, 128], sizes = [1, 128], strides = [1, 1]} : vector<1x384xf32> to vector<1x128xf32>
    %34 = arith.addf %32, %33 : vector<1x128xf32>
    %35 = arith.negf %34 : vector<1x128xf32>
    %36 = math.exp %35 : vector<1x128xf32>
    %cst_17 = arith.constant 1.000000e+00 : f32
    %37 = vector.broadcast %cst_17 : f32 to vector<1x128xf32>
    %38 = arith.addf %37, %36 : vector<1x128xf32>
    %39 = arith.divf %37, %38 : vector<1x128xf32>
    %40 = vector.extract_strided_slice %39 {offsets = [0, 0], sizes = [1, 32], strides = [1, 1]} : vector<1x128xf32> to vector<1x32xf32>
    %41 = vector.extract_strided_slice %39 {offsets = [0, 32], sizes = [1, 32], strides = [1, 1]} : vector<1x128xf32> to vector<1x32xf32>
    %42 = vector.extract_strided_slice %34 {offsets = [0, 64], sizes = [1, 32], strides = [1, 1]} : vector<1x128xf32> to vector<1x32xf32>
    %43 = vector.extract_strided_slice %34 {offsets = [0, 96], sizes = [1, 32], strides = [1, 1]} : vector<1x128xf32> to vector<1x32xf32>
    %44 = arith.mulf %40, %43 : vector<1x32xf32>
    %45 = arith.addf %42, %44 : vector<1x32xf32>
    %46 = math.tanh %45 : vector<1x32xf32>
    %cst_18 = arith.constant 1.000000e+00 : f32
    %47 = vector.broadcast %cst_18 : f32 to vector<1x32xf32>
    %48 = arith.subf %47, %41 : vector<1x32xf32>
    %49 = arith.mulf %48, %46 : vector<1x32xf32>
    %50 = arith.mulf %41, %3 : vector<1x32xf32>
    %51 = arith.addf %49, %50 : vector<1x32xf32>
    %c0_19 = arith.constant 0 : index
    %c640 = arith.constant 640 : index
    %52 = vector.load %arg3[%c0_19, %c640] : memref<72x768xf32, #tpu.memory_space<vmem>>, vector<32x128xf32>
    %cst_20 = arith.constant dense<0.000000e+00> : vector<1x128xf32>
    %53 = tpu.matmul %51, %52, %cst_20 {dimension_numbers = #tpu.dot_dimension_numbers<[1], [0], [0], [1], [0, 0, 1, 1], [], []>} : vector<1x32xf32>, vector<32x128xf32>, vector<1x128xf32> -> vector<1x128xf32>
    %c64_21 = arith.constant 64 : index
    %c640_22 = arith.constant 640 : index
    %54 = vector.load %arg3[%c64_21, %c640_22] : memref<72x768xf32, #tpu.memory_space<vmem>>, vector<1x128xf32>
    %55 = arith.addf %53, %54 : vector<1x128xf32>
    %cst_23 = arith.constant dense<0xFF800000> : vector<1xf32>
    %56 = vector.multi_reduction <maximumf>, %55, %cst_23 [1] : vector<1x128xf32> to vector<1xf32>
    %57 = vector.shape_cast %56 : vector<1xf32> to vector<1x1xf32>
    %58 = vector.broadcast %57 : vector<1x1xf32> to vector<1x128xf32>
    %59 = arith.subf %55, %58 : vector<1x128xf32>
    %60 = math.exp %59 : vector<1x128xf32>
    %cst_24 = arith.constant dense<0.000000e+00> : vector<1xf32>
    %61 = vector.multi_reduction <add>, %60, %cst_24 [1] : vector<1x128xf32> to vector<1xf32>
    %62 = vector.shape_cast %61 : vector<1xf32> to vector<1x1xf32>
    %63 = math.log %62 : vector<1x1xf32>
    %64 = vector.broadcast %63 : vector<1x1xf32> to vector<1x128xf32>
    %65 = arith.subf %59, %64 : vector<1x128xf32>
    %cst_25 = arith.constant 0.000000e+00 : f32
    %66 = vector.broadcast %cst_25 : f32 to vector<1x96xf32>
    %67 = tpu.concatenate %51, %66 in 1 : vector<1x32xf32>, vector<1x96xf32> -> vector<1x128xf32>
    %cst_26 = arith.constant 0.000000e+00 : f32
    %68 = vector.broadcast %cst_26 : f32 to vector<5x128xf32>
    %69 = tpu.concatenate %65, %67, %18, %68 in 0 : vector<1x128xf32>, vector<1x128xf32>, vector<1x128xf32>, vector<5x128xf32> -> vector<8x128xf32>
    %c0_27 = arith.constant 0 : index
    %c0_28 = arith.constant 0 : index
    %70 = vector.load %arg4[%c0_27, %c0_28] : memref<8x128xf32, #tpu.memory_space<vmem>>, vector<8x128xf32>
    tpu.vector_store %arg4[%c0_27, %c0_28], %69 {strides = array<i32>} : memref<8x128xf32, #tpu.memory_space<vmem>>, vector<8x128xf32>,
    return
  }
}

</mosaic_0001>

<llo_original>
// kernel: attn_decoder_forward.1
$region0: #{attn_decoder_forward.1}
  #allocation0 [shape = 'u32[]', space=smem, size = 0x4, offset = 0x4, fixed_abs, tag = 'smem constant byte address 0x4 - core index']
  #allocation1 [shape = 'u32[144,128]{1,0:T(1,128)}', space=vmem, size = 0x12000, scoped, tag = 'internal scratch']
  #allocation2 [shape = 's32[1]{0:T(128)S(6)}', space=smem, size = 0x200, scoped, tag = 'scoped memory for attn_decoder_forward.1']
  %s0 = inlined_call_operand.<no memory space> [shape: s32[1], index: 0, kind: input, shape index: {}]
  %s1 = inlined_call_operand.vmem [shape: f32[16,32], index: 1, kind: input, shape index: {}]
  %s2 = inlined_call_operand.vmem [shape: f32[16,32], index: 2, kind: input, shape index: {}]
  %s3 = inlined_call_operand.hbm [shape: f32[72,768], index: 3, kind: input, shape index: {}]
  %s4 = inlined_call_operand.vmem [shape: f32[8,128], index: 4, kind: output, shape index: {}]
  %s5 = sld [smem:[#allocation0]]
  $region30: #{attn_decoder_forward.1} parent=0
    _
  %s7 = ssub.s32 1, %s5
  %s8 = scalar_select 0, %s7, %s5
  %9 = sst [smem:[#allocation2]] %s0
  $region1: #{attn_decoder_forward.1} parent=0
    #allocation3 [shape = 'u8[221184]{0}', space=vmem, size = 0x36000, scoped, tag = 'input window, operand 3, single buffered']
    #allocation4 [shape = 's32[1]{0}', space=sflag, size = 0x4, scoped, tag = 'scoped memory for attn_decoder_forward.1']
    %10 = vsyncpa [#allocation4], 0
    // Predicated region
    $region2: #{attn_decoder_forward.1} parent=1 // pred_check
      _
    $region3: #{attn_decoder_forward.1} parent=1 // pred_check_branch
      %12 = sbr.rel (0) target = $region5
    $region4: #{attn_decoder_forward.1} parent=1 // pred_region
      _
    $region5: #{attn_decoder_forward.1} parent=1 // pred_fallthru
      _
    // Predicated region
    $region6: #{attn_decoder_forward.1} parent=1 // pred_check
      _
    $region7: #{attn_decoder_forward.1} parent=1 // pred_check_branch
      %14 = sbr.rel (0) target = $region9
    $region8: #{attn_decoder_forward.1} parent=1 // pred_region
      _
    $region9: #{attn_decoder_forward.1} parent=1 // pred_fallthru
      _
    // Predicated region
    $region10: #{attn_decoder_forward.1} parent=1 // pred_check
      _
    $region11: #{attn_decoder_forward.1} parent=1 // pred_check_branch
      %16 = sbr.rel (0) target = $region13
    $region12: #{attn_decoder_forward.1} parent=1 // pred_region
      _
    $region13: #{attn_decoder_forward.1} parent=1 // pred_fallthru
      _
    // Predicated region
    $region14: #{attn_decoder_forward.1} parent=1 // pred_check
      _
    $region15: #{attn_decoder_forward.1} parent=1 // pred_check_branch
      %18 = sbr.rel (0) target = $region17
    $region16: #{attn_decoder_forward.1} parent=1 // pred_region
      %s20 = ssub.s32 6912, 6912
      %21 = vsyncadd [#allocation4], %s20
      %s22 = sshll.u32 [#allocation3], 4
      %s23 = int_to_ptr.vmem [resolvable:$true] %s22
      %28 = dma.hbm_to_vmem [thread:$0]  %s3, 6912, %s23, [#allocation4], 768, 768, 48
    $region17: #{attn_decoder_forward.1} parent=1 // pred_fallthru
      _
    // Predicated region
    $region18: #{attn_decoder_forward.1} parent=1 // pred_check
      _
    $region19: #{attn_decoder_forward.1} parent=1 // pred_check_branch
      %30 = sbr.rel (0) target = $region21
    $region20: #{attn_decoder_forward.1} parent=1 // pred_region
      %31 = dma.done [#allocation4], 6912
    $region21: #{attn_decoder_forward.1} parent=1 // pred_fallthru
      _
    %s32 = sld [smem:[#allocation2]]
    %s33 = scalar_lea.vmem %s2, %s32
    %v34 = vld [vmem:[%s33] sm:$0x1]
    %v35 = vld [vmem:[%s1 + $0xa] sm:$0x1]
    %37 = vrot.lane.b32.xlu0 %v35, 32
    %v38 = vpop.permute.xlu0 %37
    %vm40 = vcmask 261120
    %v41 = vsel %vm40, %v34, %v38
    %vm42 = vcmask 523264
    %v43 = vsel %vm42, %v41, 1.0
    %vm44 = vcmask 531456
    %v45 = vsel %vm44, %v43, 0.0
    %v46 = vld [vmem:[#allocation3] sm:$0xff]
    %v47 = vld [vmem:[#allocation3 + $0x8] sm:$0xff]
    %v48 = vld [vmem:[#allocation3 + $0x10] sm:$0xff]
    %v49 = vld [vmem:[#allocation3 + $0x30] sm:$0xff]
    %v50 = vld [vmem:[#allocation3 + $0x38] sm:$0xff]
    %v51 = vld [vmem:[#allocation3 + $0x40] sm:$0xff]
    %v52 = vld [vmem:[#allocation3 + $0x60] sm:$0xff]
    %v53 = vld [vmem:[#allocation3 + $0x68] sm:$0xff]
    %v54 = vld [vmem:[#allocation3 + $0x70] sm:$0xff]
    %v55 = vld [vmem:[#allocation3 + $0x90] sm:$0xff]
    %v56 = vld [vmem:[#allocation3 + $0x98] sm:$0xff]
    %v57 = vld [vmem:[#allocation3 + $0xa0] sm:$0xff]
    %v58 = vld [vmem:[#allocation3 + $0xc0] sm:$0xff]
    %v59 = vld [vmem:[#allocation3 + $0xc8] sm:$0xff]
    %v60 = vld [vmem:[#allocation3 + $0xd0] sm:$0xff]
    %v61 = vld [vmem:[#allocation3 + $0xf0] sm:$0xff]
    %v62 = vld [vmem:[#allocation3 + $0xf8] sm:$0xff]
    %v63 = vld [vmem:[#allocation3 + $0x100] sm:$0xff]
    %v64 = vld [vmem:[#allocation3 + $0x120] sm:$0xff]
    %v65 = vld [vmem:[#allocation3 + $0x128] sm:$0xff]
    %v66 = vld [vmem:[#allocation3 + $0x130] sm:$0xff]
    %v67 = vld [vmem:[#allocation3 + $0x150] sm:$0xff]
    %v68 = vld [vmem:[#allocation3 + $0x158] sm:$0xff]
    %v69 = vld [vmem:[#allocation3 + $0x160] sm:$0xff]
    %v70 = vld [vmem:[#allocation3 + $0x180] sm:$0xff]
    %v71 = vld [vmem:[#allocation3 + $0x188] sm:$0xff]
    %v72 = vld [vmem:[#allocation3 + $0x190] sm:$0xff]
    %vm73 = vcmask 588800
    %v75 = vsel %vm73, %v45, 0
    %77 = vmatprep.subr.mxu0 0.0
    %78 = vmatpush1.msra.mxu0 0.0
    %79 = vmatprep.subr.mxu0 0.0
    %80 = vmatpush1.msra.mxu0 0.0
    %81 = vmatprep.subr.mxu0 0.0
    %82 = vmatpush1.msra.mxu0 0.0
    %83 = vmatprep.subr.mxu0 0.0
    %84 = vmatpush1.msra.mxu0 0.0
    %85 = vmatprep.subr.mxu0 0.0
    %86 = vmatpush1.msra.mxu0 0.0
    %87 = vmatprep.subr.mxu0 0.0
    %88 = vmatpush1.msra.mxu0 0.0
    %89 = vmatprep.subr.mxu0 0.0
    %90 = vmatpush1.msra.mxu0 0.0
    %91 = vmatprep.subr.mxu0 %v71
    %92 = vmatpush1.msra.mxu0 %v70
    %93 = vmatprep.subr.mxu0 %v68
    %94 = vmatpush1.msra.mxu0 %v67
    %95 = vmatprep.subr.mxu0 %v65
    %96 = vmatpush1.msra.mxu0 %v64
    %97 = vmatprep.subr.mxu0 %v62
    %98 = vmatpush1.msra.mxu0 %v61
    %99 = vmatprep.subr.mxu0 %v59
    %100 = vmatpush1.msra.mxu0 %v58
    %101 = vmatprep.subr.mxu0 %v56
    %102 = vmatpush1.msra.mxu0 %v55
    %103 = vmatprep.subr.mxu0 %v53
    %104 = vmatpush1.msra.mxu0 %v52
    %105 = vmatprep.subr.mxu0 %v50
    %106 = vmatpush1.msra.mxu0 %v49
    %107 = vmatprep.subr.mxu0 %v47
    %108 = vmatpush1.msra.mxu0 %v46
    %109 = vmatprep.subr.mxu0 0.0
    %110 = vmatpush2.msra.mxu0 0.0
    %111 = vmatprep.subr.mxu0 0.0
    %112 = vmatpush2.msra.mxu0 0.0
    %113 = vmatprep.subr.mxu0 0.0
    %114 = vmatpush2.msra.mxu0 0.0
    %115 = vmatprep.subr.mxu0 0.0
    %116 = vmatpush2.msra.mxu0 0.0
    %117 = vmatprep.subr.mxu0 0.0
    %118 = vmatpush2.msra.mxu0 0.0
    %119 = vmatprep.subr.mxu0 0.0
    %120 = vmatpush2.msra.mxu0 0.0
    %121 = vmatprep.subr.mxu0 0.0
    %122 = vmatpush2.msra.mxu0 0.0
    %123 = vmatprep.subr.mxu0 0.0
    %124 = vmatpush2.msra.mxu0 0.0
    %125 = vmatprep.subr.mxu0 0.0
    %126 = vmatpush2.msra.mxu0 0.0
    %127 = vmatprep.subr.mxu0 0.0
    %128 = vmatpush2.msra.mxu0 0.0
    %129 = vmatprep.subr.mxu0 0.0
    %130 = vmatpush2.msra.mxu0 0.0
    %131 = vmatprep.subr.mxu0 0.0
    %132 = vmatpush2.msra.mxu0 0.0
    %133 = vmatprep.subr.mxu0 0.0
    %134 = vmatpush2.msra.mxu0 0.0
    %135 = vmatprep.subr.mxu0 0.0
    %136 = vmatpush2.msra.mxu0 0.0
    %137 = vmatprep.subr.mxu0 0.0
    %138 = vmatpush2.msra.mxu0 0.0
    %139 = vmatprep.subr.mxu0 0.0
    %140 = vmatpush2.msra.mxu0 0.0
    %141 = vmatprep.mubr.f32.mxu0 0.0
    %142 = vmatmul.mubr.f32.gmra.mxu0 %v75
    %v143 = vpop.f32.mrf.mxu0
    %v144 = vadd.f32 0.0, %v143
    %v145 = vpop.f32.mrf.mxu0
    %v146 = vadd.f32 0.0, %v145
    %147 = vdwg.mxu0
    %148 = vmatprep.subr.mxu0 0.0
    %149 = vmatpush1.msra.mxu0 0.0
    %150 = vmatprep.subr.mxu0 0.0
    %151 = vmatpush1.msra.mxu0 0.0
    %152 = vmatprep.subr.mxu0 0.0
    %153 = vmatpush1.msra.mxu0 0.0
    %154 = vmatprep.subr.mxu0 0.0
    %155 = vmatpush1.msra.mxu0 0.0
    %156 = vmatprep.subr.mxu0 0.0
    %157 = vmatpush1.msra.mxu0 0.0
    %158 = vmatprep.subr.mxu0 0.0
    %159 = vmatpush1.msra.mxu0 0.0
    %160 = vmatprep.subr.mxu0 0.0
    %161 = vmatpush1.msra.mxu0 0.0
    %162 = vmatprep.subr.mxu0 0.0
    %163 = vmatpush1.msra.mxu0 %v72
    %164 = vmatprep.subr.mxu0 0.0
    %165 = vmatpush1.msra.mxu0 %v69
    %166 = vmatprep.subr.mxu0 0.0
    %167 = vmatpush1.msra.mxu0 %v66
    %168 = vmatprep.subr.mxu0 0.0
    %169 = vmatpush1.msra.mxu0 %v63
    %170 = vmatprep.subr.mxu0 0.0
    %171 = vmatpush1.msra.mxu0 %v60
    %172 = vmatprep.subr.mxu0 0.0
    %173 = vmatpush1.msra.mxu0 %v57
    %174 = vmatprep.subr.mxu0 0.0
    %175 = vmatpush1.msra.mxu0 %v54
    %176 = vmatprep.subr.mxu0 0.0
    %177 = vmatpush1.msra.mxu0 %v51
    %178 = vmatprep.subr.mxu0 0.0
    %179 = vmatpush1.msra.mxu0 %v48
    %180 = vmatprep.subr.mxu0 0.0
    %181 = vmatpush2.msra.mxu0 0.0
    %182 = vmatprep.subr.mxu0 0.0
    %183 = vmatpush2.msra.mxu0 0.0
    %184 = vmatprep.subr.mxu0 0.0
    %185 = vmatpush2.msra.mxu0 0.0
    %186 = vmatprep.subr.mxu0 0.0
    %187 = vmatpush2.msra.mxu0 0.0
    %188 = vmatprep.subr.mxu0 0.0
    %189 = vmatpush2.msra.mxu0 0.0
    %190 = vmatprep.subr.mxu0 0.0
    %191 = vmatpush2.msra.mxu0 0.0
    %192 = vmatprep.subr.mxu0 0.0
    %193 = vmatpush2.msra.mxu0 0.0
    %194 = vmatprep.subr.mxu0 0.0
    %195 = vmatpush2.msra.mxu0 0.0
    %196 = vmatprep.subr.mxu0 0.0
    %197 = vmatpush2.msra.mxu0 0.0
    %198 = vmatprep.subr.mxu0 0.0
    %199 = vmatpush2.msra.mxu0 0.0
    %200 = vmatprep.subr.mxu0 0.0
    %201 = vmatpush2.msra.mxu0 0.0
    %202 = vmatprep.subr.mxu0 0.0
    %203 = vmatpush2.msra.mxu0 0.0
    %204 = vmatprep.subr.mxu0 0.0
    %205 = vmatpush2.msra.mxu0 0.0
    %206 = vmatprep.subr.mxu0 0.0
    %207 = vmatpush2.msra.mxu0 0.0
    %208 = vmatprep.subr.mxu0 0.0
    %209 = vmatpush2.msra.mxu0 0.0
    %210 = vmatprep.subr.mxu0 0.0
    %211 = vmatpush2.msra.mxu0 0.0
    %212 = vmatprep.mubr.f32.mxu0 0.0
    %213 = vmatmul.mubr.f32.gmra.mxu0 %v75
    %v214 = vpop.f32.mrf.mxu0
    %v215 = vadd.f32 0.0, %v214
    %v216 = vpop.f32.mrf.mxu0
    %217 = vdwg.mxu0
    %vm218 = vcmask 1040384
    %v219 = vsel %vm218, %v144, -inf
    %220 = vmax.xlane.f32.xlu0 %v219
    %v221 = vpop.xlane.xlu0 %220
    %v222 = vsub.f32 %v144, %v221
    %v223 = vmul.f32 %v222, 1.442695
    %v224 = vpow.pop %v223
    %v225 = vsel %vm218, %v224, 0.0
    %226 = vadd.xlane.f32.xlu0 %v225
    %v227 = vpop.xlane.xlu0 %226
    %v228 = vrcp.pop %v227
    %v229 = vmul.f32 %v224, %v228
    %v230 = vld [vmem:[%s1] sm:$0xff]
    %v231 = vld [vmem:[%s1 + $0x8] sm:$0xff]
    %vm232 = vcmask 130048
    %v234 = vsel %vm232, %v229, 0
    %236 = vmatprep.subr.mxu0 0.0
    %237 = vmatpush1.msra.mxu0 0.0
    %238 = vmatprep.subr.mxu0 0.0
    %239 = vmatpush1.msra.mxu0 0.0
    %240 = vmatprep.subr.mxu0 0.0
    %241 = vmatpush1.msra.mxu0 0.0
    %242 = vmatprep.subr.mxu0 0.0
    %243 = vmatpush1.msra.mxu0 0.0
    %244 = vmatprep.subr.mxu0 0.0
    %245 = vmatpush1.msra.mxu0 0.0
    %246 = vmatprep.subr.mxu0 0.0
    %247 = vmatpush1.msra.mxu0 0.0
    %248 = vmatprep.subr.mxu0 0.0
    %249 = vmatpush1.msra.mxu0 0.0
    %250 = vmatprep.subr.mxu0 0.0
    %251 = vmatpush1.msra.mxu0 0.0
    %252 = vmatprep.subr.mxu0 0.0
    %253 = vmatpush1.msra.mxu0 0.0
    %254 = vmatprep.subr.mxu0 0.0
    %255 = vmatpush1.msra.mxu0 0.0
    %256 = vmatprep.subr.mxu0 0.0
    %257 = vmatpush1.msra.mxu0 0.0
    %258 = vmatprep.subr.mxu0 0.0
    %259 = vmatpush1.msra.mxu0 0.0
    %260 = vmatprep.subr.mxu0 0.0
    %261 = vmatpush1.msra.mxu0 0.0
    %262 = vmatprep.subr.mxu0 0.0
    %263 = vmatpush1.msra.mxu0 0.0
    %264 = vmatprep.subr.mxu0 0.0
    %265 = vmatpush1.msra.mxu0 %v231
    %266 = vmatprep.subr.mxu0 0.0
    %267 = vmatpush1.msra.mxu0 %v230
    %268 = vmatprep.subr.mxu0 0.0
    %269 = vmatpush2.msra.mxu0 0.0
    %270 = vmatprep.subr.mxu0 0.0
    %271 = vmatpush2.msra.mxu0 0.0
    %272 = vmatprep.subr.mxu0 0.0
    %273 = vmatpush2.msra.mxu0 0.0
    %274 = vmatprep.subr.mxu0 0.0
    %275 = vmatpush2.msra.mxu0 0.0
    %276 = vmatprep.subr.mxu0 0.0
    %277 = vmatpush2.msra.mxu0 0.0
    %278 = vmatprep.subr.mxu0 0.0
    %279 = vmatpush2.msra.mxu0 0.0
    %280 = vmatprep.subr.mxu0 0.0
    %281 = vmatpush2.msra.mxu0 0.0
    %282 = vmatprep.subr.mxu0 0.0
    %283 = vmatpush2.msra.mxu0 0.0
    %284 = vmatprep.subr.mxu0 0.0
    %285 = vmatpush2.msra.mxu0 0.0
    %286 = vmatprep.subr.mxu0 0.0
    %287 = vmatpush2.msra.mxu0 0.0
    %288 = vmatprep.subr.mxu0 0.0
    %289 = vmatpush2.msra.mxu0 0.0
    %290 = vmatprep.subr.mxu0 0.0
    %291 = vmatpush2.msra.mxu0 0.0
    %292 = vmatprep.subr.mxu0 0.0
    %293 = vmatpush2.msra.mxu0 0.0
    %294 = vmatprep.subr.mxu0 0.0
    %295 = vmatpush2.msra.mxu0 0.0
    %296 = vmatprep.subr.mxu0 0.0
    %297 = vmatpush2.msra.mxu0 0.0
    %298 = vmatprep.subr.mxu0 0.0
    %299 = vmatpush2.msra.mxu0 0.0
    %300 = vmatprep.mubr.f32.mxu0 0.0
    %301 = vmatmul.mubr.f32.gmra.mxu0 %v234
    %v302 = vpop.f32.mrf.mxu0
    %v303 = vadd.f32 0.0, %v302
    %v304 = vpop.f32.mrf.mxu0
    %305 = vdwg.mxu0
    %v306 = vld [vmem:[#allocation3 + $0x18] sm:$0xff]
    %v307 = vld [vmem:[#allocation3 + $0x48] sm:$0xff]
    %v308 = vld [vmem:[#allocation3 + $0x78] sm:$0xff]
    %v309 = vld [vmem:[#allocation3 + $0xa8] sm:$0xff]
    %v311 = vsel %vm40, %v303, 0
    %313 = vmatprep.subr.mxu0 0.0
    %314 = vmatpush1.msra.mxu0 0.0
    %315 = vmatprep.subr.mxu0 0.0
    %316 = vmatpush1.msra.mxu0 0.0
    %317 = vmatprep.subr.mxu0 0.0
    %318 = vmatpush1.msra.mxu0 0.0
    %319 = vmatprep.subr.mxu0 0.0
    %320 = vmatpush1.msra.mxu0 0.0
    %321 = vmatprep.subr.mxu0 0.0
    %322 = vmatpush1.msra.mxu0 0.0
    %323 = vmatprep.subr.mxu0 0.0
    %324 = vmatpush1.msra.mxu0 0.0
    %325 = vmatprep.subr.mxu0 0.0
    %326 = vmatpush1.msra.mxu0 0.0
    %327 = vmatprep.subr.mxu0 0.0
    %328 = vmatpush1.msra.mxu0 0.0
    %329 = vmatprep.subr.mxu0 0.0
    %330 = vmatpush1.msra.mxu0 0.0
    %331 = vmatprep.subr.mxu0 0.0
    %332 = vmatpush1.msra.mxu0 0.0
    %333 = vmatprep.subr.mxu0 0.0
    %334 = vmatpush1.msra.mxu0 0.0
    %335 = vmatprep.subr.mxu0 0.0
    %336 = vmatpush1.msra.mxu0 0.0
    %337 = vmatprep.subr.mxu0 0.0
    %338 = vmatpush1.msra.mxu0 %v309
    %339 = vmatprep.subr.mxu0 0.0
    %340 = vmatpush1.msra.mxu0 %v308
    %341 = vmatprep.subr.mxu0 0.0
    %342 = vmatpush1.msra.mxu0 %v307
    %343 = vmatprep.subr.mxu0 0.0
    %344 = vmatpush1.msra.mxu0 %v306
    %345 = vmatprep.subr.mxu0 0.0
    %346 = vmatpush2.msra.mxu0 0.0
    %347 = vmatprep.subr.mxu0 0.0
    %348 = vmatpush2.msra.mxu0 0.0
    %349 = vmatprep.subr.mxu0 0.0
    %350 = vmatpush2.msra.mxu0 0.0
    %351 = vmatprep.subr.mxu0 0.0
    %352 = vmatpush2.msra.mxu0 0.0
    %353 = vmatprep.subr.mxu0 0.0
    %354 = vmatpush2.msra.mxu0 0.0
    %355 = vmatprep.subr.mxu0 0.0
    %356 = vmatpush2.msra.mxu0 0.0
    %357 = vmatprep.subr.mxu0 0.0
    %358 = vmatpush2.msra.mxu0 0.0
    %359 = vmatprep.subr.mxu0 0.0
    %360 = vmatpush2.msra.mxu0 0.0
    %361 = vmatprep.subr.mxu0 0.0
    %362 = vmatpush2.msra.mxu0 0.0
    %363 = vmatprep.subr.mxu0 0.0
    %364 = vmatpush2.msra.mxu0 0.0
    %365 = vmatprep.subr.mxu0 0.0
    %366 = vmatpush2.msra.mxu0 0.0
    %367 = vmatprep.subr.mxu0 0.0
    %368 = vmatpush2.msra.mxu0 0.0
    %369 = vmatprep.subr.mxu0 0.0
    %370 = vmatpush2.msra.mxu0 0.0
    %371 = vmatprep.subr.mxu0 0.0
    %372 = vmatpush2.msra.mxu0 0.0
    %373 = vmatprep.subr.mxu0 0.0
    %374 = vmatpush2.msra.mxu0 0.0
    %375 = vmatprep.subr.mxu0 0.0
    %376 = vmatpush2.msra.mxu0 0.0
    %377 = vmatprep.mubr.f32.mxu0 0.0
    %378 = vmatmul.mubr.f32.gmra.mxu0 %v311
    %v379 = vpop.f32.mrf.mxu0
    %v380 = vadd.f32 0.0, %v379
    %v381 = vpop.f32.mrf.mxu0
    %382 = vdwg.mxu0
    %v383 = vadd.f32 %v215, %v380
    %v384 = vmax.f32 %v383, 0.0
    %v385 = vld [vmem:[#allocation3 + $0x20] sm:$0xff]
    %v386 = vld [vmem:[#allocation3 + $0x50] sm:$0xff]
    %v387 = vld [vmem:[#allocation3 + $0x80] sm:$0xff]
    %v388 = vld [vmem:[#allocation3 + $0xb0] sm:$0xff]
    %v389 = vld [vmem:[#allocation3 + $0x1a0] ss:$0 sm:$0xff]
    %v391 = vsel %vm40, %v384, 0
    %393 = vmatprep.subr.mxu0 0.0
    %394 = vmatpush1.msra.mxu0 0.0
    %395 = vmatprep.subr.mxu0 0.0
    %396 = vmatpush1.msra.mxu0 0.0
    %397 = vmatprep.subr.mxu0 0.0
    %398 = vmatpush1.msra.mxu0 0.0
    %399 = vmatprep.subr.mxu0 0.0
    %400 = vmatpush1.msra.mxu0 0.0
    %401 = vmatprep.subr.mxu0 0.0
    %402 = vmatpush1.msra.mxu0 0.0
    %403 = vmatprep.subr.mxu0 0.0
    %404 = vmatpush1.msra.mxu0 0.0
    %405 = vmatprep.subr.mxu0 0.0
    %406 = vmatpush1.msra.mxu0 0.0
    %407 = vmatprep.subr.mxu0 0.0
    %408 = vmatpush1.msra.mxu0 0.0
    %409 = vmatprep.subr.mxu0 0.0
    %410 = vmatpush1.msra.mxu0 0.0
    %411 = vmatprep.subr.mxu0 0.0
    %412 = vmatpush1.msra.mxu0 0.0
    %413 = vmatprep.subr.mxu0 0.0
    %414 = vmatpush1.msra.mxu0 0.0
    %415 = vmatprep.subr.mxu0 0.0
    %416 = vmatpush1.msra.mxu0 0.0
    %417 = vmatprep.subr.mxu0 0.0
    %418 = vmatpush1.msra.mxu0 %v388
    %419 = vmatprep.subr.mxu0 0.0
    %420 = vmatpush1.msra.mxu0 %v387
    %421 = vmatprep.subr.mxu0 0.0
    %422 = vmatpush1.msra.mxu0 %v386
    %423 = vmatprep.subr.mxu0 0.0
    %424 = vmatpush1.msra.mxu0 %v385
    %425 = vmatprep.subr.mxu0 0.0
    %426 = vmatpush2.msra.mxu0 0.0
    %427 = vmatprep.subr.mxu0 0.0
    %428 = vmatpush2.msra.mxu0 0.0
    %429 = vmatprep.subr.mxu0 0.0
    %430 = vmatpush2.msra.mxu0 0.0
    %431 = vmatprep.subr.mxu0 0.0
    %432 = vmatpush2.msra.mxu0 0.0
    %433 = vmatprep.subr.mxu0 0.0
    %434 = vmatpush2.msra.mxu0 0.0
    %435 = vmatprep.subr.mxu0 0.0
    %436 = vmatpush2.msra.mxu0 0.0
    %437 = vmatprep.subr.mxu0 0.0
    %438 = vmatpush2.msra.mxu0 0.0
    %439 = vmatprep.subr.mxu0 0.0
    %440 = vmatpush2.msra.mxu0 0.0
    %441 = vmatprep.subr.mxu0 0.0
    %442 = vmatpush2.msra.mxu0 0.0
    %443 = vmatprep.subr.mxu0 0.0
    %444 = vmatpush2.msra.mxu0 0.0
    %445 = vmatprep.subr.mxu0 0.0
    %446 = vmatpush2.msra.mxu0 0.0
    %447 = vmatprep.subr.mxu0 0.0
    %448 = vmatpush2.msra.mxu0 0.0
    %449 = vmatprep.subr.mxu0 0.0
    %450 = vmatpush2.msra.mxu0 0.0
    %451 = vmatprep.subr.mxu0 0.0
    %452 = vmatpush2.msra.mxu0 0.0
    %453 = vmatprep.subr.mxu0 0.0
    %454 = vmatpush2.msra.mxu0 0.0
    %455 = vmatprep.subr.mxu0 0.0
    %456 = vmatpush2.msra.mxu0 0.0
    %457 = vmatprep.mubr.f32.mxu0 0.0
    %458 = vmatmul.mubr.f32.gmra.mxu0 %v391
    %v459 = vpop.f32.mrf.mxu0
    %v460 = vadd.f32 %v389, %v459
    %v461 = vpop.f32.mrf.mxu0
    %462 = vdwg.mxu0
    %v463 = vadd.f32 %v460, %v146
    %v464 = vxor.u32 %v463, 2147483648
    %v465 = vmul.f32 %v464, 1.442695
    %v466 = vpow.pop %v465
    %v467 = vadd.f32 %v466, 1.0
    %v468 = vrcp.pop %v467
    %v469 = vmul.f32 1.0, %v468
    %471 = vrot.lane.b32.xlu0 %v463, 32
    %v472 = vpop.permute.xlu0 %471
    %v474 = vmul.f32 %v469, %v472
    %476 = vrot.lane.b32.xlu0 %v474, 64
    %v477 = vpop.permute.xlu0 %476
    %v479 = vadd.f32 %v463, %v477
    %v480 = vtanh.pop %v479
    %v481 = vsub.f32 1.0, %v469
    %483 = vrot.lane.b32.xlu0 %v480, 96
    %v484 = vpop.permute.xlu0 %483
    %v486 = vmul.f32 %v481, %v484
    %v487 = vmul.f32 %v469, %v38
    %v488 = vadd.f32 %v486, %v487
    %v489 = vld [vmem:[#allocation3 + $0x28] sm:$0xff]
    %v490 = vld [vmem:[#allocation3 + $0x58] sm:$0xff]
    %v491 = vld [vmem:[#allocation3 + $0x88] sm:$0xff]
    %v492 = vld [vmem:[#allocation3 + $0xb8] sm:$0xff]
    %v493 = vld [vmem:[#allocation3 + $0x1a8] ss:$0 sm:$0xff]
    %495 = vrot.lane.b32.xlu0 %v488, 96
    %v496 = vpop.permute.xlu0 %495
    %v497 = vsel %vm40, %v496, 0
    %499 = vmatprep.subr.mxu0 0.0
    %500 = vmatpush1.msra.mxu0 0.0
    %501 = vmatprep.subr.mxu0 0.0
    %502 = vmatpush1.msra.mxu0 0.0
    %503 = vmatprep.subr.mxu0 0.0
    %504 = vmatpush1.msra.mxu0 0.0
    %505 = vmatprep.subr.mxu0 0.0
    %506 = vmatpush1.msra.mxu0 0.0
    %507 = vmatprep.subr.mxu0 0.0
    %508 = vmatpush1.msra.mxu0 0.0
    %509 = vmatprep.subr.mxu0 0.0
    %510 = vmatpush1.msra.mxu0 0.0
    %511 = vmatprep.subr.mxu0 0.0
    %512 = vmatpush1.msra.mxu0 0.0
    %513 = vmatprep.subr.mxu0 0.0
    %514 = vmatpush1.msra.mxu0 0.0
    %515 = vmatprep.subr.mxu0 0.0
    %516 = vmatpush1.msra.mxu0 0.0
    %517 = vmatprep.subr.mxu0 0.0
    %518 = vmatpush1.msra.mxu0 0.0
    %519 = vmatprep.subr.mxu0 0.0
    %520 = vmatpush1.msra.mxu0 0.0
    %521 = vmatprep.subr.mxu0 0.0
    %522 = vmatpush1.msra.mxu0 0.0
    %523 = vmatprep.subr.mxu0 0.0
    %524 = vmatpush1.msra.mxu0 %v492
    %525 = vmatprep.subr.mxu0 0.0
    %526 = vmatpush1.msra.mxu0 %v491
    %527 = vmatprep.subr.mxu0 0.0
    %528 = vmatpush1.msra.mxu0 %v490
    %529 = vmatprep.subr.mxu0 0.0
    %530 = vmatpush1.msra.mxu0 %v489
    %531 = vmatprep.subr.mxu0 0.0
    %532 = vmatpush2.msra.mxu0 0.0
    %533 = vmatprep.subr.mxu0 0.0
    %534 = vmatpush2.msra.mxu0 0.0
    %535 = vmatprep.subr.mxu0 0.0
    %536 = vmatpush2.msra.mxu0 0.0
    %537 = vmatprep.subr.mxu0 0.0
    %538 = vmatpush2.msra.mxu0 0.0
    %539 = vmatprep.subr.mxu0 0.0
    %540 = vmatpush2.msra.mxu0 0.0
    %541 = vmatprep.subr.mxu0 0.0
    %542 = vmatpush2.msra.mxu0 0.0
    %543 = vmatprep.subr.mxu0 0.0
    %544 = vmatpush2.msra.mxu0 0.0
    %545 = vmatprep.subr.mxu0 0.0
    %546 = vmatpush2.msra.mxu0 0.0
    %547 = vmatprep.subr.mxu0 0.0
    %548 = vmatpush2.msra.mxu0 0.0
    %549 = vmatprep.subr.mxu0 0.0
    %550 = vmatpush2.msra.mxu0 0.0
    %551 = vmatprep.subr.mxu0 0.0
    %552 = vmatpush2.msra.mxu0 0.0
    %553 = vmatprep.subr.mxu0 0.0
    %554 = vmatpush2.msra.mxu0 0.0
    %555 = vmatprep.subr.mxu0 0.0
    %556 = vmatpush2.msra.mxu0 0.0
    %557 = vmatprep.subr.mxu0 0.0
    %558 = vmatpush2.msra.mxu0 0.0
    %559 = vmatprep.subr.mxu0 0.0
    %560 = vmatpush2.msra.mxu0 0.0
    %561 = vmatprep.subr.mxu0 0.0
    %562 = vmatpush2.msra.mxu0 0.0
    %563 = vmatprep.mubr.f32.mxu0 0.0
    %564 = vmatmul.mubr.f32.gmra.mxu0 %v497
    %v565 = vpop.f32.mrf.mxu0
    %v566 = vadd.f32 %v493, %v565
    %v567 = vpop.f32.mrf.mxu0
    %568 = vdwg.mxu0
    %v569 = vsel %vm218, %v566, -inf
    %570 = vmax.xlane.f32.xlu0 %v569
    %v571 = vpop.xlane.xlu0 %570
    %v572 = vsub.f32 %v566, %v571
    %v573 = vmul.f32 %v572, 1.442695
    %v574 = vpow.pop %v573
    %v575 = vsel %vm218, %v574, 0.0
    %576 = vadd.xlane.f32.xlu0 %v575
    %v577 = vpop.xlane.xlu0 %576
    %v578 = vlog2.pop %v577
    %v579 = vmul.f32 %v578, 0.6931472
    %v580 = vsub.f32 %v572, %v579
    %v582 = vsel %vm40, %v496, 0.0
    %v584 = vrot.slane %v582, 7
    %v586 = vrot.slane %v229, 6
    %v588 = vsel %vm218, %v580, %v584
    %vm589 = vcmask 1041408
    %v590 = vsel %vm589, %v588, %v586
    %vm591 = vcmask 1042432
    %v592 = vsel %vm591, %v590, 0.0
    %593 = vst [vmem:[%s4] sm:$0xff] %v592
    // Predicated region
    $region22: #{attn_decoder_forward.1} parent=1 // pred_check
      _
    $region23: #{attn_decoder_forward.1} parent=1 // pred_check_branch
      %595 = sbr.rel (0) target = $region25
    $region24: #{attn_decoder_forward.1} parent=1 // pred_region
      _
    $region25: #{attn_decoder_forward.1} parent=1 // pred_fallthru
      _
    // Predicated region
    $region26: #{attn_decoder_forward.1} parent=1 // pred_check
      _
    $region27: #{attn_decoder_forward.1} parent=1 // pred_check_branch
      %597 = sbr.rel (0) target = $region29
    $region28: #{attn_decoder_forward.1} parent=1 // pred_region
      _
    $region29: #{attn_decoder_forward.1} parent=1 // pred_fallthru
      _
    %598 = vsyncpa [#allocation4], 1

</llo_original>
